<compile_context>
chip_gen: v7x
topology: tpu7x:2x2x1
jax: 0.10.0
libtpu: 0.0.40
codegen_flags: <defaults>
</compile_context>

<pallas_src>
import functools

import jax
import jax.numpy as jnp
from jax.experimental import pallas as pl
from jax.experimental.pallas import tpu as pltpu


def _round_up(x: int, m: int) -> int:
    return ((x + m - 1) // m) * m


# --------------------------------------------------------------------------
# Primary path: whole weight resident in VMEM, 1-D grid over row tiles.
# --------------------------------------------------------------------------
def _sgc_resident_kernel(x_ref, w_ref, b_ref, o_ref, *, compute_dtype):
    # x_ref: (TN, F)   w_ref: (F, C)   b_ref: (1, C)   o_ref: (TN, C)
    x = x_ref[...]
    if compute_dtype is not None:
        x = x.astype(compute_dtype)          # in-kernel cast (VPU has slack)
    o_ref[...] = (
        jnp.dot(x, w_ref[...], preferred_element_type=jnp.float32) + b_ref[...]
    ).astype(o_ref.dtype)


def _sgc_resident(x, w_t, b, *, tile_n, cast_bf16, vmem_budget_bytes):
    N, F = x.shape
    _, C = w_t.shape

    compute_dtype = jnp.bfloat16 if cast_bf16 else None
    w_in = w_t.astype(jnp.bfloat16) if cast_bf16 else w_t     # tiny, cast once
    b_in = b.astype(jnp.float32).reshape(1, C)

    # Row tile: sublane-aligned and clamped to the problem size.
    tile_n = max(8, min(tile_n, _round_up(N, 8)))
    tile_n = _round_up(tile_n, 8)

    # Shrink the row tile until the VMEM estimate fits the budget
    # (keeps double-buffering intact on v7x's 64 MiB per-TC VMEM).
    x_item = jnp.dtype(x.dtype).itemsize
    w_item = jnp.dtype(w_in.dtype).itemsize
    f_lanes = _round_up(F, 128)
    c_lanes = _round_up(C, 128)
    w_resident = _round_up(F, 8) * c_lanes * w_item + c_lanes * 4

    def vmem_est(tn):
        return (w_resident
                + 2 * tn * f_lanes * x_item       # x tile, double-buffered
                + 2 * tn * c_lanes * 4)           # out tile, double-buffered

    while tile_n > 8 and vmem_est(tile_n) > vmem_budget_bytes:
        tile_n = max(8, _round_up(tile_n // 2, 8))

    grid = (pl.cdiv(N, tile_n),)   # masked short last tile; no N padding copy

    kernel = functools.partial(_sgc_resident_kernel, compute_dtype=compute_dtype)

    return pl.pallas_call(
        kernel,
        out_shape=jax.ShapeDtypeStruct((N, C), jnp.float32),
        grid_spec=pltpu.PrefetchScalarGridSpec(
            num_scalar_prefetch=0,
            grid=grid,
            in_specs=[
                pl.BlockSpec((tile_n, F), lambda i: (i, 0)),   # x row tile
                pl.BlockSpec((F, C), lambda i: (0, 0)),        # weight, resident
                pl.BlockSpec((1, C), lambda i: (0, 0)),        # bias, resident
            ],
            out_specs=pl.BlockSpec((tile_n, C), lambda i: (i, 0)),
        ),
        compiler_params=pltpu.CompilerParams(
            dimension_semantics=("parallel",),     # split row tiles across TCs
            vmem_limit_bytes=48 * 1024 * 1024,     # < 64 MiB physical on v7x
        ),
    )(x, w_in, b_in)


# --------------------------------------------------------------------------
# Fallback path: K-tiled 3-D grid for weights too large to keep VMEM-resident.
# --------------------------------------------------------------------------
def _sgc_ktiled_kernel(x_ref, w_ref, b_ref, o_ref, acc_ref):
    k = pl.program_id(2)

    @pl.when(k == 0)
    def _():
        acc_ref[...] = jnp.zeros_like(acc_ref)

    acc_ref[...] += jnp.dot(
        x_ref[...], w_ref[...], preferred_element_type=jnp.float32
    )

    @pl.when(k == pl.num_programs(2) - 1)
    def _():
        o_ref[...] = (acc_ref[...] + b_ref[...]).astype(o_ref.dtype)


def _sgc_ktiled(x, w_t, b, *, tile_n, tile_c, tile_k, cast_bf16):
    N, F = x.shape
    _, C = w_t.shape

    tile_n = max(8, _round_up(min(tile_n, _round_up(N, 8)), 8))
    tile_c = min(tile_c, _round_up(C, 128))
    tile_k = min(tile_k, _round_up(F, 128))

    N_p = _round_up(N, tile_n)
    C_p = _round_up(C, tile_c)
    F_p = _round_up(F, tile_k)

    in_dtype = jnp.bfloat16 if cast_bf16 else x.dtype

    # Zero-padding keeps the valid region exact; padded bias is 0.
    x_p = jnp.pad(x, ((0, N_p - N), (0, F_p - F))).astype(in_dtype)
    w_p = jnp.pad(w_t, ((0, F_p - F), (0, C_p - C))).astype(in_dtype)
    b_p = jnp.pad(b.astype(jnp.float32), (0, C_p - C)).reshape(1, C_p)

    grid = (N_p // tile_n, C_p // tile_c, F_p // tile_k)

    out_p = pl.pallas_call(
        _sgc_ktiled_kernel,
        out_shape=jax.ShapeDtypeStruct((N_p, C_p), jnp.float32),
        grid_spec=pltpu.PrefetchScalarGridSpec(
            num_scalar_prefetch=0,
            grid=grid,
            in_specs=[
                pl.BlockSpec((tile_n, tile_k), lambda i, j, k: (i, k)),
                pl.BlockSpec((tile_k, tile_c), lambda i, j, k: (k, j)),
                pl.BlockSpec((1, tile_c), lambda i, j, k: (0, j)),
            ],
            out_specs=pl.BlockSpec((tile_n, tile_c), lambda i, j, k: (i, j)),
            scratch_shapes=[pltpu.VMEM((tile_n, tile_c), jnp.float32)],
        ),
        compiler_params=pltpu.CompilerParams(
            dimension_semantics=("parallel", "parallel", "arbitrary"),
            vmem_limit_bytes=48 * 1024 * 1024,
        ),
    )(x_p, w_p, b_p)

    return out_p[:N, :C]


# --------------------------------------------------------------------------
# Public entry point.
# --------------------------------------------------------------------------
@functools.partial(
    jax.jit,
    static_argnames=(
        "tile_n", "tile_c", "tile_k", "cast_bf16",
        "weight_vmem_budget_bytes", "vmem_budget_bytes",
    ),
)
def sgc_forward(
    x, w_t, b, *,
    tile_n=1024, tile_c=512, tile_k=512, cast_bf16=False,
    weight_vmem_budget_bytes=8 * 1024 * 1024,
    vmem_budget_bytes=32 * 1024 * 1024,
):
    """x: (N, F), w_t: (F, C) (transposed nn.Linear weight), b: (C,) -> (N, C) f32."""
    N, F = x.shape
    F2, C = w_t.shape
    assert F2 == F, "weight must be provided as (F, C)"

    w_item = 2 if cast_bf16 else jnp.dtype(w_t.dtype).itemsize
    w_bytes = _round_up(F, 8) * _round_up(C, 128) * w_item

    if w_bytes <= weight_vmem_budget_bytes:
        return _sgc_resident(
            x, w_t, b,
            tile_n=tile_n, cast_bf16=cast_bf16,
            vmem_budget_bytes=vmem_budget_bytes,
        )
    return _sgc_ktiled(
        x, w_t, b,
        tile_n=tile_n, tile_c=tile_c, tile_k=tile_k, cast_bf16=cast_bf16,
    )


if __name__ == "__main__":
    # Small shapes implied by the module: x is (num_nodes, nfeat) -> (num_nodes, nclass)
    num_nodes, nfeat, nclass = 64, 32, 8

    key = jax.random.PRNGKey(0)
    kx, kw, kb = jax.random.split(key, 3)

    # Deterministic init mirroring nn.Linear default: U(-1/sqrt(nfeat), 1/sqrt(nfeat))
    bound = 1.0 / (nfeat ** 0.5)
    W = jax.random.uniform(kw, (nclass, nfeat), jnp.float32, -bound, bound)  # (out, in)
    b = jax.random.uniform(kb, (nclass,), jnp.float32, -bound, bound)

    x = jax.random.normal(kx, (num_nodes, nfeat), jnp.float32)

    # Reference (same math as torch.nn.Linear), computed in f32.
    ref = x @ W.T + b

    # 1) Primary resident-weight path, exact f32 compute (default).
    out = jax.block_until_ready(sgc_forward(x, W.T, b))
    assert out.shape == (num_nodes, nclass)
    assert jnp.allclose(out, ref, atol=1e-5, rtol=1e-5), "f32 resident path mismatch"

    # 2) Resident path with in-kernel bf16 cast (HBM-traffic option).
    out_bf16 = jax.block_until_ready(sgc_forward(x, W.T, b, cast_bf16=True))
    assert jnp.allclose(out_bf16, ref, atol=2e-2, rtol=2e-2), "bf16 path mismatch"

    # 3) Force the K-tiled fallback (as used when the weight exceeds VMEM budget).
    out_kt = jax.block_until_ready(
        sgc_forward(x, W.T, b, weight_vmem_budget_bytes=0)
    )
    assert jnp.allclose(out_kt, ref, atol=1e-5, rtol=1e-5), "K-tiled fallback mismatch"

    print("KERNEL_OK")
</pallas_src>

<mosaic_0001>
module attributes {stable_mosaic.version = 11 : i64} {
  func.func @_sgc_resident_kernel(%arg0: i32, %arg1: memref<64x32xf32, #tpu.memory_space<vmem>>, %arg2: memref<32x8xf32, #tpu.memory_space<vmem>>, %arg3: memref<1x8xf32, #tpu.memory_space<vmem>>, %arg4: memref<64x8xf32, #tpu.memory_space<vmem>>) attributes {dimension_semantics = [#tpu.dimension_semantics<parallel>], iteration_bounds = array<i64: 1>, scalar_prefetch = 0 : i64, scratch_operands = 0 : i64, tpu.core_type = #tpu.core_type<tc>, window_params = [{transform_indices = @transform_0, window_bounds = array<i64: 64, 32>}, {pipeline_mode = #tpu.pipeline_mode<synchronous>, transform_indices = @transform_1, window_bounds = array<i64: 32, 8>}, {pipeline_mode = #tpu.pipeline_mode<synchronous>, transform_indices = @transform_2, window_bounds = array<i64: 1, 8>}, {transform_indices = @transform_3, window_bounds = array<i64: 64, 8>}]} {
    %c0 = arith.constant 0 : index
    %c0_0 = arith.constant 0 : index
    %0 = vector.load %arg1[%c0, %c0_0] : memref<64x32xf32, #tpu.memory_space<vmem>>, vector<64x32xf32>
    %c0_1 = arith.constant 0 : index
    %c0_2 = arith.constant 0 : index
    %1 = vector.load %arg2[%c0_1, %c0_2] : memref<32x8xf32, #tpu.memory_space<vmem>>, vector<32x8xf32>
    %cst = arith.constant dense<0.000000e+00> : vector<64x8xf32>
    %2 = tpu.matmul %0, %1, %cst {dimension_numbers = #tpu.dot_dimension_numbers<[1], [0], [0], [1], [0, 0, 1, 1], [], []>} : vector<64x32xf32>, vector<32x8xf32>, vector<64x8xf32> -> vector<64x8xf32>
    %c0_3 = arith.constant 0 : index
    %c0_4 = arith.constant 0 : index
    %3 = vector.load %arg3[%c0_3, %c0_4] : memref<1x8xf32, #tpu.memory_space<vmem>>, vector<1x8xf32>
    %4 = vector.broadcast %3 : vector<1x8xf32> to vector<64x8xf32>
    %5 = arith.addf %2, %4 : vector<64x8xf32>
    %c0_5 = arith.constant 0 : index
    %c0_6 = arith.constant 0 : index
    %6 = vector.load %arg4[%c0_5, %c0_6] : memref<64x8xf32, #tpu.memory_space<vmem>>, vector<64x8xf32>
    tpu.vector_store %arg4[%c0_5, %c0_6], %5 {strides = array<i32>} : memref<64x8xf32, #tpu.memory_space<vmem>>, vector<64x8xf32>,
    return
  }
  func.func @transform_0(%arg0: i32) -> (i32, i32) {
    %c0_i32 = arith.constant 0 : i32
    %c0_i32_0 = arith.constant 0 : i32
    return %arg0, %c0_i32 : i32, i32
  }
  func.func @transform_1(%arg0: i32) -> (i32, i32) {
    %c0_i32 = arith.constant 0 : i32
    %c0_i32_0 = arith.constant 0 : i32
    %c0_i32_1 = arith.constant 0 : i32
    return %c0_i32, %c0_i32_0 : i32, i32
  }
  func.func @transform_2(%arg0: i32) -> (i32, i32) {
    %c0_i32 = arith.constant 0 : i32
    %c0_i32_0 = arith.constant 0 : i32
    %c0_i32_1 = arith.constant 0 : i32
    return %c0_i32, %c0_i32_0 : i32, i32
  }
  func.func @transform_3(%arg0: i32) -> (i32, i32) {
    %c0_i32 = arith.constant 0 : i32
    %c0_i32_0 = arith.constant 0 : i32
    return %arg0, %c0_i32 : i32, i32
  }
}

</mosaic_0001>

<llo_original>
// kernel: sgc_forward.1
$region0: #{sgc_forward.1}
  #allocation0 [shape = 'u32[]', space=smem, size = 0x4, offset = 0x4, fixed_abs, tag = 'smem constant byte address 0x4 - core index']
  #allocation1 [shape = 'u32[144,128]{1,0:T(1,128)}', space=vmem, size = 0x12000, scoped, tag = 'internal scratch']
  %s0 = inlined_call_operand.vmem [shape: f32[64,32], index: 0, kind: input, shape index: {}]
  %s1 = inlined_call_operand.vmem [shape: f32[32,8], index: 1, kind: input, shape index: {}]
  %s2 = inlined_call_operand.vmem [shape: f32[1,8], index: 2, kind: input, shape index: {}]
  %s3 = inlined_call_operand.vmem [shape: f32[64,8], index: 3, kind: output, shape index: {}]
  %s4 = sld [smem:[#allocation0]]
  $region22: #{sgc_forward.1} parent=0
    _
  %s6 = ssub.s32 1, %s4
  %s7 = scalar_select 0, %s6, %s4
  // Predicated region
  $region2: #{sgc_forward.1} parent=0 // pred_check
    _
  $region3: #{sgc_forward.1} parent=0 // pred_check_branch
    %9 = sbr.rel (0) target = $region5
  $region4: #{sgc_forward.1} parent=0 // pred_region
    _
  $region5: #{sgc_forward.1} parent=0 // pred_fallthru
    _
  // Predicated region
  $region6: #{sgc_forward.1} parent=0 // pred_check
    _
  $region7: #{sgc_forward.1} parent=0 // pred_check_branch
    %11 = sbr.rel (0) target = $region9
  $region8: #{sgc_forward.1} parent=0 // pred_region
    _
  $region9: #{sgc_forward.1} parent=0 // pred_fallthru
    _
  // Predicated region
  $region10: #{sgc_forward.1} parent=0 // pred_check
    _
  $region11: #{sgc_forward.1} parent=0 // pred_check_branch
    %13 = sbr.rel (0) target = $region13
  $region12: #{sgc_forward.1} parent=0 // pred_region
    _
  $region13: #{sgc_forward.1} parent=0 // pred_fallthru
    _
  %v14 = vld [vmem:[%s0] sm:$0xff]
  %v15 = vld [vmem:[%s0 + $0x8] sm:$0xff]
  %v16 = vld [vmem:[%s0 + $0x10] sm:$0xff]
  %v17 = vld [vmem:[%s0 + $0x18] sm:$0xff]
  %v18 = vld [vmem:[%s0 + $0x20] sm:$0xff]
  %v19 = vld [vmem:[%s0 + $0x28] sm:$0xff]
  %v20 = vld [vmem:[%s0 + $0x30] sm:$0xff]
  %v21 = vld [vmem:[%s0 + $0x38] sm:$0xff]
  %v22 = vld [vmem:[%s1] sm:$0xff]
  %v23 = vld [vmem:[%s1 + $0x8] sm:$0xff]
  %v24 = vld [vmem:[%s1 + $0x10] sm:$0xff]
  %v25 = vld [vmem:[%s1 + $0x18] sm:$0xff]
  %v26 = vld [vmem:[%s2] sm:$0x1]
  %v28 = vlaneseq
  %v29 = vshrl.u32 %v28, 7
  %v30 = vsub.s32 0, %v29
  %v31 = vrot.slane %v26, %v30
  %vm33 = vcmask 261120
  %v35 = vsel %vm33, %v14, 0
  %v38 = vsel %vm33, %v15, 0
  %v41 = vsel %vm33, %v16, 0
  %v44 = vsel %vm33, %v17, 0
  %v47 = vsel %vm33, %v18, 0
  %v50 = vsel %vm33, %v19, 0
  %v53 = vsel %vm33, %v20, 0
  %v56 = vsel %vm33, %v21, 0
  %58 = vmatprep.subr.mxu0 0.0
  %59 = vmatpush1.msra.mxu0 %v22
  %60 = vmatprep.subr.mxu0 0.0
  %61 = vmatpush1.msra.mxu0 %v23
  %62 = vmatprep.subr.mxu0 0.0
  %63 = vmatpush1.msra.mxu0 %v24
  %64 = vmatprep.subr.mxu0 0.0
  %65 = vmatpush1.msra.mxu0 %v25
  %66 = vmatprep.subr.mxu0 0.0
  %67 = vmatpush1.msra.mxu0 0.0
  %68 = vmatprep.subr.mxu0 0.0
  %69 = vmatpush1.msra.mxu0 0.0
  %70 = vmatprep.subr.mxu0 0.0
  %71 = vmatpush1.msra.mxu0 0.0
  %72 = vmatprep.subr.mxu0 0.0
  %73 = vmatpush1.msra.mxu0 0.0
  %74 = vmatprep.subr.mxu0 0.0
  %75 = vmatpush1.msra.mxu0 0.0
  %76 = vmatprep.subr.mxu0 0.0
  %77 = vmatpush1.msra.mxu0 0.0
  %78 = vmatprep.subr.mxu0 0.0
  %79 = vmatpush1.msra.mxu0 0.0
  %80 = vmatprep.subr.mxu0 0.0
  %81 = vmatpush1.msra.mxu0 0.0
  %82 = vmatprep.subr.mxu0 0.0
  %83 = vmatpush1.msra.mxu0 0.0
  %84 = vmatprep.subr.mxu0 0.0
  %85 = vmatpush1.msra.mxu0 0.0
  %86 = vmatprep.subr.mxu0 0.0
  %87 = vmatpush1.msra.mxu0 0.0
  %88 = vmatprep.subr.mxu0 0.0
  %89 = vmatpush1.msra.mxu0 0.0
  %90 = vmatprep.subr.mxu0 0.0
  %91 = vmatpush1.msra.mxu0 0.0
  %92 = vmatprep.subr.mxu0 0.0
  %93 = vmatpush1.msra.mxu0 0.0
  %94 = vmatprep.subr.mxu0 0.0
  %95 = vmatpush1.msra.mxu0 0.0
  %96 = vmatprep.subr.mxu0 0.0
  %97 = vmatpush1.msra.mxu0 0.0
  %98 = vmatprep.subr.mxu0 0.0
  %99 = vmatpush1.msra.mxu0 0.0
  %100 = vmatprep.subr.mxu0 0.0
  %101 = vmatpush1.msra.mxu0 0.0
  %102 = vmatprep.subr.mxu0 0.0
  %103 = vmatpush1.msra.mxu0 0.0
  %104 = vmatprep.subr.mxu0 0.0
  %105 = vmatpush1.msra.mxu0 0.0
  %106 = vmatprep.subr.mxu0 0.0
  %107 = vmatpush1.msra.mxu0 0.0
  %108 = vmatprep.subr.mxu0 0.0
  %109 = vmatpush1.msra.mxu0 0.0
  %110 = vmatprep.subr.mxu0 0.0
  %111 = vmatpush1.msra.mxu0 0.0
  %112 = vmatprep.subr.mxu0 0.0
  %113 = vmatpush1.msra.mxu0 0.0
  %114 = vmatprep.subr.mxu0 0.0
  %115 = vmatpush1.msra.mxu0 0.0
  %116 = vmatprep.subr.mxu0 0.0
  %117 = vmatpush1.msra.mxu0 0.0
  %118 = vmatprep.subr.mxu0 0.0
  %119 = vmatpush1.msra.mxu0 0.0
  %120 = vmatprep.subr.mxu0 0.0
  %121 = vmatpush1.msra.mxu0 0.0
  %122 = vmatprep.mubr.f32.mxu0 0.0
  %123 = vmatmul.mubr.f32.gmra.mrb[0].mxu0 %v35
  %v124 = vpop.f32.mrb[0].mxu0
  %v125 = vadd.f32 %v31, %v124
  %v126 = vpop.f32.mrb[0].mxu0
  %127 = vmatprep.mubr.f32.mxu0 0.0
  %128 = vmatmul.mubr.f32.gmra.mrb[0].mxu0 %v38
  %v129 = vpop.f32.mrb[0].mxu0
  %v130 = vadd.f32 %v31, %v129
  %v131 = vpop.f32.mrb[0].mxu0
  %132 = vmatprep.mubr.f32.mxu0 0.0
  %133 = vmatmul.mubr.f32.gmra.mrb[0].mxu0 %v41
  %v134 = vpop.f32.mrb[0].mxu0
  %v135 = vadd.f32 %v31, %v134
  %v136 = vpop.f32.mrb[0].mxu0
  %137 = vmatprep.mubr.f32.mxu0 0.0
  %138 = vmatmul.mubr.f32.gmra.mrb[0].mxu0 %v44
  %v139 = vpop.f32.mrb[0].mxu0
  %v140 = vadd.f32 %v31, %v139
  %v141 = vpop.f32.mrb[0].mxu0
  %142 = vmatprep.mubr.f32.mxu0 0.0
  %143 = vmatmul.mubr.f32.gmra.mrb[0].mxu0 %v47
  %v144 = vpop.f32.mrb[0].mxu0
  %v145 = vadd.f32 %v31, %v144
  %v146 = vpop.f32.mrb[0].mxu0
  %147 = vmatprep.mubr.f32.mxu0 0.0
  %148 = vmatmul.mubr.f32.gmra.mrb[0].mxu0 %v50
  %v149 = vpop.f32.mrb[0].mxu0
  %v150 = vadd.f32 %v31, %v149
  %v151 = vpop.f32.mrb[0].mxu0
  %152 = vmatprep.mubr.f32.mxu0 0.0
  %153 = vmatmul.mubr.f32.gmra.mrb[0].mxu0 %v53
  %v154 = vpop.f32.mrb[0].mxu0
  %v155 = vadd.f32 %v31, %v154
  %v156 = vpop.f32.mrb[0].mxu0
  %157 = vmatprep.mubr.f32.mxu0 0.0
  %158 = vmatmul.mubr.f32.gmra.mrb[0].mxu0 %v56
  %v159 = vpop.f32.mrb[0].mxu0
  %v160 = vadd.f32 %v31, %v159
  %v161 = vpop.f32.mrb[0].mxu0
  %162 = vdwg.mxu0
  %vm163 = vcmask 64512
  %164 = vst.msk [vmem:[%s3] sm:$0xff] %vm163, %v125
  %165 = vst.msk [vmem:[%s3 + $0x8] sm:$0xff] %vm163, %v130
  %166 = vst.msk [vmem:[%s3 + $0x10] sm:$0xff] %vm163, %v135
  %167 = vst.msk [vmem:[%s3 + $0x18] sm:$0xff] %vm163, %v140
  %168 = vst.msk [vmem:[%s3 + $0x20] sm:$0xff] %vm163, %v145
  %169 = vst.msk [vmem:[%s3 + $0x28] sm:$0xff] %vm163, %v150
  %170 = vst.msk [vmem:[%s3 + $0x30] sm:$0xff] %vm163, %v155
  %171 = vst.msk [vmem:[%s3 + $0x38] sm:$0xff] %vm163, %v160
  // Predicated region
  $region14: #{sgc_forward.1} parent=0 // pred_check
    _
  $region15: #{sgc_forward.1} parent=0 // pred_check_branch
    %173 = sbr.rel (0) target = $region17
  $region16: #{sgc_forward.1} parent=0 // pred_region
    _
  $region17: #{sgc_forward.1} parent=0 // pred_fallthru
    _
  // Predicated region
  $region18: #{sgc_forward.1} parent=0 // pred_check
    _
  $region19: #{sgc_forward.1} parent=0 // pred_check_branch
    %175 = sbr.rel (0) target = $region21
  $region20: #{sgc_forward.1} parent=0 // pred_region
    _
  $region21: #{sgc_forward.1} parent=0 // pred_fallthru
    _

</llo_original>
